<compile_context>
chip_gen: v6e
topology: v6e:2x2x1
jax: 0.10.0
libtpu: 0.0.40
codegen_flags: <defaults>
</compile_context>

<pallas_src>
import functools

import jax
import jax.numpy as jnp
from jax.experimental import pallas as pl
from jax.experimental.pallas import tpu as pltpu


def _round_up(x: int, m: int) -> int:
    return ((x + m - 1) // m) * m


def _forward_mlp_kernel(enc_ref, act_ref, lstm_ref,
                        w1e_ref, w1a_ref, w1h_ref, b1_ref,
                        w2_ref, b2_ref, o_ref, *, use_bf16: bool):
    # enc/act/lstm: (TB, d_*)   w1*: (d_*, H_pad)   b1: (1, H_pad)
    # w2: (H_pad, O_pad)        b2: (1, O_pad)      o:  (TB, O_pad)
    def _dot(a, b):
        if use_bf16:
            a = a.astype(jnp.bfloat16)
            b = b.astype(jnp.bfloat16)
        return jnp.dot(a, b, preferred_element_type=jnp.float32)

    # Fused "concat": three partial dots against row-slices of fc1's weight,
    # accumulated in f32.
    h = _dot(enc_ref[...], w1e_ref[...])
    h = h + _dot(act_ref[...], w1a_ref[...])
    h = h + _dot(lstm_ref[...], w1h_ref[...])
    h = h + b1_ref[...]
    h = jnp.maximum(h, 0.0)                       # act1 = ReLU (f32 epilogue)

    y = _dot(h, w2_ref[...]) + b2_ref[...]
    o_ref[...] = jnp.maximum(y, 0.0).astype(o_ref.dtype)   # output_activation


def forward_model_pallas(encoded_now, all_actions, moa_lstm_h, params,
                         *, block_batch: int = 512, use_bf16: bool = False):
    """Pallas implementation of ForwardModel.forward."""
    w1, b1, w2, b2 = params["w1"], params["b1"], params["w2"], params["b2"]

    d_enc = encoded_now.shape[-1]
    d_act = all_actions.shape[-1]
    d_h = moa_lstm_h.shape[-1]
    assert w1.shape[0] == d_enc + d_act + d_h
    fc_hidden = w1.shape[1]
    out_dim = w2.shape[1]
    dtype = encoded_now.dtype

    # --- Lane padding of hidden / output feature dims (zero pads are inert). ---
    H = _round_up(fc_hidden, 128)
    O = _round_up(out_dim, 128)
    w1p = jnp.pad(w1, ((0, 0), (0, H - fc_hidden)))
    b1p = jnp.pad(b1, ((0, 0), (0, H - fc_hidden)))
    w2p = jnp.pad(w2, ((0, H - fc_hidden), (0, O - out_dim)))
    b2p = jnp.pad(b2, ((0, 0), (0, O - out_dim)))

    # Row-split fc1 weight so the concat is fused into the kernel.
    w1e = w1p[:d_enc]
    w1a = w1p[d_enc:d_enc + d_act]
    w1h = w1p[d_enc + d_act:]

    # --- Batch tiling (pad rows to a multiple of the tile). ---
    batch = encoded_now.shape[0]
    TB = min(block_batch, _round_up(batch, 8))   # sublane-aligned tile
    PB = _round_up(batch, TB)
    if PB != batch:
        pad = ((0, PB - batch), (0, 0))
        encoded_now = jnp.pad(encoded_now, pad)
        all_actions = jnp.pad(all_actions, pad)
        moa_lstm_h = jnp.pad(moa_lstm_h, pad)

    grid = (PB // TB,)
    # VMEM budget (f32, TB=512, H=O=128): inputs ~64 KiB + out ~256 KiB per
    # buffer (x2 double-buffered) + ~80 KiB resident weights -> well under the
    # 32 MiB scoped default on every generation (v5e/v6e/v7x).
    kernel = functools.partial(_forward_mlp_kernel, use_bf16=use_bf16)

    result = pl.pallas_call(
        kernel,
        out_shape=jax.ShapeDtypeStruct((PB, O), dtype),
        grid_spec=pltpu.PrefetchScalarGridSpec(
            num_scalar_prefetch=0,
            grid=grid,
            in_specs=[
                # Batch-tiled activations.
                pl.BlockSpec((TB, d_enc), lambda i: (i, 0)),
                pl.BlockSpec((TB, d_act), lambda i: (i, 0)),
                pl.BlockSpec((TB, d_h), lambda i: (i, 0)),
                # Weights/biases: same block every step -> VMEM-resident.
                pl.BlockSpec(w1e.shape, lambda i: (0, 0)),
                pl.BlockSpec(w1a.shape, lambda i: (0, 0)),
                pl.BlockSpec(w1h.shape, lambda i: (0, 0)),
                pl.BlockSpec(b1p.shape, lambda i: (0, 0)),
                pl.BlockSpec(w2p.shape, lambda i: (0, 0)),
                pl.BlockSpec(b2p.shape, lambda i: (0, 0)),
            ],
            out_specs=pl.BlockSpec((TB, O), lambda i: (i, 0)),
        ),
        compiler_params=pltpu.CompilerParams(
            dimension_semantics=("parallel",),
        ),
    )(encoded_now, all_actions, moa_lstm_h, w1e, w1a, w1h, b1p, w2p, b2p)

    # Drop batch padding and lane padding.
    return result[:batch, :out_dim]


def init_params(key, encoded_state_dim, all_actions_dim, lstm_hidden_dim,
                fc_hidden_dim=32):
    """Deterministic init mirroring nn.Linear defaults (uniform +-1/sqrt(fan_in))."""
    input_dim = encoded_state_dim + all_actions_dim + lstm_hidden_dim
    k1, k2, k3, k4 = jax.random.split(key, 4)
    bound1 = 1.0 / (input_dim ** 0.5)
    bound2 = 1.0 / (fc_hidden_dim ** 0.5)
    # Stored transposed vs PyTorch: (in_dim, out_dim) so the kernel does x @ W.
    w1 = jax.random.uniform(k1, (input_dim, fc_hidden_dim), jnp.float32, -bound1, bound1)
    b1 = jax.random.uniform(k2, (1, fc_hidden_dim), jnp.float32, -bound1, bound1)
    w2 = jax.random.uniform(k3, (fc_hidden_dim, encoded_state_dim), jnp.float32, -bound2, bound2)
    b2 = jax.random.uniform(k4, (1, encoded_state_dim), jnp.float32, -bound2, bound2)
    return {"w1": w1, "b1": b1, "w2": w2, "b2": b2}


def forward_model_ref(encoded_now, all_actions, moa_lstm_h, params):
    """Plain-JAX reference for correctness checking."""
    x = jnp.concatenate([encoded_now, all_actions, moa_lstm_h], axis=-1)
    h = jnp.maximum(x @ params["w1"] + params["b1"], 0.0)
    y = jnp.maximum(h @ params["w2"] + params["b2"], 0.0)
    return y


if __name__ == "__main__":
    key = jax.random.PRNGKey(0)
    encoded_state_dim = 8
    all_actions_dim = 8
    lstm_hidden_dim = 16
    fc_hidden_dim = 32

    kp, k_enc, k_act, k_h = jax.random.split(key, 4)
    params = init_params(kp, encoded_state_dim, all_actions_dim, lstm_hidden_dim,
                         fc_hidden_dim)

    # --- Small shapes matching the module spec (batch=2). ---
    batch = 2
    encoded_now = jax.random.normal(k_enc, (batch, encoded_state_dim), jnp.float32)
    all_actions = jax.random.normal(k_act, (batch, all_actions_dim), jnp.float32)
    moa_lstm_h = jax.random.normal(k_h, (batch, lstm_hidden_dim), jnp.float32)

    out = forward_model_pallas(encoded_now, all_actions, moa_lstm_h, params)
    out = jax.block_until_ready(out)
    ref = forward_model_ref(encoded_now, all_actions, moa_lstm_h, params)
    assert out.shape == (batch, encoded_state_dim)
    assert jnp.allclose(out, ref, atol=1e-5, rtol=1e-5)

    # --- Larger, non-multiple-of-8 batch: exercises batch tiling + remainder pad. ---
    big = 523
    kb1, kb2, kb3 = jax.random.split(jax.random.PRNGKey(1), 3)
    enc_b = jax.random.normal(kb1, (big, encoded_state_dim), jnp.float32)
    act_b = jax.random.normal(kb2, (big, all_actions_dim), jnp.float32)
    h_b = jax.random.normal(kb3, (big, lstm_hidden_dim), jnp.float32)

    out_b = forward_model_pallas(enc_b, act_b, h_b, params)
    out_b = jax.block_until_ready(out_b)
    ref_b = forward_model_ref(enc_b, act_b, h_b, params)
    assert out_b.shape == (big, encoded_state_dim)
    assert jnp.allclose(out_b, ref_b, atol=1e-5, rtol=1e-5)

    # --- Optional bf16 MXU path (v6e/v7x throughput; f32 accumulate/epilogue). ---
    out_bf16 = forward_model_pallas(enc_b, act_b, h_b, params, use_bf16=True)
    out_bf16 = jax.block_until_ready(out_bf16)
    assert jnp.allclose(out_bf16, ref_b, atol=1e-1, rtol=1e-1)

    print("KERNEL_OK")
</pallas_src>

<mosaic_0001>
module attributes {stable_mosaic.version = 11 : i64} {
  func.func @_forward_mlp_kernel(%arg0: i32, %arg1: memref<8x8xf32, #tpu.memory_space<vmem>>, %arg2: memref<8x8xf32, #tpu.memory_space<vmem>>, %arg3: memref<8x16xf32, #tpu.memory_space<vmem>>, %arg4: memref<8x128xf32, #tpu.memory_space<vmem>>, %arg5: memref<8x128xf32, #tpu.memory_space<vmem>>, %arg6: memref<16x128xf32, #tpu.memory_space<vmem>>, %arg7: memref<1x128xf32, #tpu.memory_space<vmem>>, %arg8: memref<128x128xf32, #tpu.memory_space<vmem>>, %arg9: memref<1x128xf32, #tpu.memory_space<vmem>>, %arg10: memref<8x128xf32, #tpu.memory_space<vmem>>) attributes {dimension_semantics = [#tpu.dimension_semantics<parallel>], iteration_bounds = array<i64: 1>, scalar_prefetch = 0 : i64, scratch_operands = 0 : i64, tpu.core_type = #tpu.core_type<tc>, window_params = [{transform_indices = @transform_0, window_bounds = array<i64: 8, 8>}, {transform_indices = @transform_1, window_bounds = array<i64: 8, 8>}, {transform_indices = @transform_2, window_bounds = array<i64: 8, 16>}, {pipeline_mode = #tpu.pipeline_mode<synchronous>, transform_indices = @transform_3, window_bounds = array<i64: 8, 128>}, {pipeline_mode = #tpu.pipeline_mode<synchronous>, transform_indices = @transform_4, window_bounds = array<i64: 8, 128>}, {pipeline_mode = #tpu.pipeline_mode<synchronous>, transform_indices = @transform_5, window_bounds = array<i64: 16, 128>}, {pipeline_mode = #tpu.pipeline_mode<synchronous>, transform_indices = @transform_6, window_bounds = array<i64: 1, 128>}, {pipeline_mode = #tpu.pipeline_mode<synchronous>, transform_indices = @transform_7, window_bounds = array<i64: 128, 128>}, {pipeline_mode = #tpu.pipeline_mode<synchronous>, transform_indices = @transform_8, window_bounds = array<i64: 1, 128>}, {transform_indices = @transform_9, window_bounds = array<i64: 8, 128>}]} {
    %c0 = arith.constant 0 : index
    %c0_0 = arith.constant 0 : index
    %0 = vector.load %arg1[%c0, %c0_0] : memref<8x8xf32, #tpu.memory_space<vmem>>, vector<8x8xf32>
    %c0_1 = arith.constant 0 : index
    %c0_2 = arith.constant 0 : index
    %1 = vector.load %arg4[%c0_1, %c0_2] : memref<8x128xf32, #tpu.memory_space<vmem>>, vector<8x128xf32>
    %cst = arith.constant dense<0.000000e+00> : vector<8x128xf32>
    %2 = tpu.matmul %0, %1, %cst {dimension_numbers = #tpu.dot_dimension_numbers<[1], [0], [0], [1], [0, 0, 1, 1], [], []>} : vector<8x8xf32>, vector<8x128xf32>, vector<8x128xf32> -> vector<8x128xf32>
    %c0_3 = arith.constant 0 : index
    %c0_4 = arith.constant 0 : index
    %3 = vector.load %arg2[%c0_3, %c0_4] : memref<8x8xf32, #tpu.memory_space<vmem>>, vector<8x8xf32>
    %c0_5 = arith.constant 0 : index
    %c0_6 = arith.constant 0 : index
    %4 = vector.load %arg5[%c0_5, %c0_6] : memref<8x128xf32, #tpu.memory_space<vmem>>, vector<8x128xf32>
    %cst_7 = arith.constant dense<0.000000e+00> : vector<8x128xf32>
    %5 = tpu.matmul %3, %4, %cst_7 {dimension_numbers = #tpu.dot_dimension_numbers<[1], [0], [0], [1], [0, 0, 1, 1], [], []>} : vector<8x8xf32>, vector<8x128xf32>, vector<8x128xf32> -> vector<8x128xf32>
    %6 = arith.addf %2, %5 : vector<8x128xf32>
    %c0_8 = arith.constant 0 : index
    %c0_9 = arith.constant 0 : index
    %7 = vector.load %arg3[%c0_8, %c0_9] : memref<8x16xf32, #tpu.memory_space<vmem>>, vector<8x16xf32>
    %c0_10 = arith.constant 0 : index
    %c0_11 = arith.constant 0 : index
    %8 = vector.load %arg6[%c0_10, %c0_11] : memref<16x128xf32, #tpu.memory_space<vmem>>, vector<16x128xf32>
    %cst_12 = arith.constant dense<0.000000e+00> : vector<8x128xf32>
    %9 = tpu.matmul %7, %8, %cst_12 {dimension_numbers = #tpu.dot_dimension_numbers<[1], [0], [0], [1], [0, 0, 1, 1], [], []>} : vector<8x16xf32>, vector<16x128xf32>, vector<8x128xf32> -> vector<8x128xf32>
    %10 = arith.addf %6, %9 : vector<8x128xf32>
    %c0_13 = arith.constant 0 : index
    %c0_14 = arith.constant 0 : index
    %11 = vector.load %arg7[%c0_13, %c0_14] : memref<1x128xf32, #tpu.memory_space<vmem>>, vector<1x128xf32>
    %12 = vector.broadcast %11 : vector<1x128xf32> to vector<8x128xf32>
    %13 = arith.addf %10, %12 : vector<8x128xf32>
    %cst_15 = arith.constant 0.000000e+00 : f32
    %14 = vector.broadcast %cst_15 : f32 to vector<8x128xf32>
    %15 = arith.maximumf %13, %14 : vector<8x128xf32>
    %c0_16 = arith.constant 0 : index
    %c0_17 = arith.constant 0 : index
    %16 = vector.load %arg8[%c0_16, %c0_17] : memref<128x128xf32, #tpu.memory_space<vmem>>, vector<128x128xf32>
    %cst_18 = arith.constant dense<0.000000e+00> : vector<8x128xf32>
    %17 = tpu.matmul %15, %16, %cst_18 {dimension_numbers = #tpu.dot_dimension_numbers<[1], [0], [0], [1], [0, 0, 1, 1], [], []>} : vector<8x128xf32>, vector<128x128xf32>, vector<8x128xf32> -> vector<8x128xf32>
    %c0_19 = arith.constant 0 : index
    %c0_20 = arith.constant 0 : index
    %18 = vector.load %arg9[%c0_19, %c0_20] : memref<1x128xf32, #tpu.memory_space<vmem>>, vector<1x128xf32>
    %19 = vector.broadcast %18 : vector<1x128xf32> to vector<8x128xf32>
    %20 = arith.addf %17, %19 : vector<8x128xf32>
    %cst_21 = arith.constant 0.000000e+00 : f32
    %21 = vector.broadcast %cst_21 : f32 to vector<8x128xf32>
    %22 = arith.maximumf %20, %21 : vector<8x128xf32>
    %c0_22 = arith.constant 0 : index
    %c0_23 = arith.constant 0 : index
    %23 = vector.load %arg10[%c0_22, %c0_23] : memref<8x128xf32, #tpu.memory_space<vmem>>, vector<8x128xf32>
    tpu.vector_store %arg10[%c0_22, %c0_23], %22 {strides = array<i32>} : memref<8x128xf32, #tpu.memory_space<vmem>>, vector<8x128xf32>,
    return
  }
  func.func @transform_0(%arg0: i32) -> (i32, i32) {
    %c0_i32 = arith.constant 0 : i32
    %c0_i32_0 = arith.constant 0 : i32
    return %arg0, %c0_i32 : i32, i32
  }
  func.func @transform_1(%arg0: i32) -> (i32, i32) {
    %c0_i32 = arith.constant 0 : i32
    %c0_i32_0 = arith.constant 0 : i32
    return %arg0, %c0_i32 : i32, i32
  }
  func.func @transform_2(%arg0: i32) -> (i32, i32) {
    %c0_i32 = arith.constant 0 : i32
    %c0_i32_0 = arith.constant 0 : i32
    return %arg0, %c0_i32 : i32, i32
  }
  func.func @transform_3(%arg0: i32) -> (i32, i32) {
    %c0_i32 = arith.constant 0 : i32
    %c0_i32_0 = arith.constant 0 : i32
    %c0_i32_1 = arith.constant 0 : i32
    return %c0_i32, %c0_i32_0 : i32, i32
  }
  func.func @transform_4(%arg0: i32) -> (i32, i32) {
    %c0_i32 = arith.constant 0 : i32
    %c0_i32_0 = arith.constant 0 : i32
    %c0_i32_1 = arith.constant 0 : i32
    return %c0_i32, %c0_i32_0 : i32, i32
  }
  func.func @transform_5(%arg0: i32) -> (i32, i32) {
    %c0_i32 = arith.constant 0 : i32
    %c0_i32_0 = arith.constant 0 : i32
    %c0_i32_1 = arith.constant 0 : i32
    return %c0_i32, %c0_i32_0 : i32, i32
  }
  func.func @transform_6(%arg0: i32) -> (i32, i32) {
    %c0_i32 = arith.constant 0 : i32
    %c0_i32_0 = arith.constant 0 : i32
    %c0_i32_1 = arith.constant 0 : i32
    return %c0_i32, %c0_i32_0 : i32, i32
  }
  func.func @transform_7(%arg0: i32) -> (i32, i32) {
    %c0_i32 = arith.constant 0 : i32
    %c0_i32_0 = arith.constant 0 : i32
    %c0_i32_1 = arith.constant 0 : i32
    return %c0_i32, %c0_i32_0 : i32, i32
  }
  func.func @transform_8(%arg0: i32) -> (i32, i32) {
    %c0_i32 = arith.constant 0 : i32
    %c0_i32_0 = arith.constant 0 : i32
    %c0_i32_1 = arith.constant 0 : i32
    return %c0_i32, %c0_i32_0 : i32, i32
  }
  func.func @transform_9(%arg0: i32) -> (i32, i32) {
    %c0_i32 = arith.constant 0 : i32
    %c0_i32_0 = arith.constant 0 : i32
    return %arg0, %c0_i32 : i32, i32
  }
}

</mosaic_0001>

<llo_original>
// kernel: tpu_custom_call.1
$region0: #{tpu_custom_call.1}
  #allocation0 [shape = 'u32[]', space=smem, size = 0x4, offset = 0x4, fixed_abs, tag = 'smem constant byte address 0x4 - core index']
  #allocation1 [shape = 'u32[144,128]{1,0:T(1,128)}', space=vmem, size = 0x12000, scoped, tag = 'internal scratch']
  %s0 = inlined_call_operand.hbm [shape: f32[8,8], index: 0, kind: input, shape index: {}]
  %s1 = inlined_call_operand.hbm [shape: f32[8,8], index: 1, kind: input, shape index: {}]
  %s2 = inlined_call_operand.hbm [shape: f32[8,16], index: 2, kind: input, shape index: {}]
  %s3 = inlined_call_operand.hbm [shape: f32[8,128], index: 3, kind: input, shape index: {}]
  %s4 = inlined_call_operand.hbm [shape: f32[8,128], index: 4, kind: input, shape index: {}]
  %s5 = inlined_call_operand.hbm [shape: f32[16,128], index: 5, kind: input, shape index: {}]
  %s6 = inlined_call_operand.vmem [shape: f32[1,128], index: 6, kind: input, shape index: {}]
  %s7 = inlined_call_operand.hbm [shape: f32[128,128], index: 7, kind: input, shape index: {}]
  %s8 = inlined_call_operand.vmem [shape: f32[1,128], index: 8, kind: input, shape index: {}]
  %s9 = inlined_call_operand.hbm [shape: f32[8,128], index: 9, kind: output, shape index: {}]
  %s10 = sld [smem:[#allocation0]]
  $region74: #{tpu_custom_call.1} parent=0
    _
  %s12 = ssub.s32 1, %s10
  %s13 = scalar_select 0, %s12, %s10
  $region1: #{tpu_custom_call.1} parent=0
    #allocation2 [shape = 'u8[4096]{0}', space=vmem, size = 0x1000, scoped, tag = 'input window, operand 0, single buffered']
    #allocation3 [shape = 's32[1]{0}', space=sflag, size = 0x4, scoped, tag = 'scoped memory for tpu_custom_call.1']
    #allocation4 [shape = 's32[1]{0}', space=sflag, size = 0x4, scoped, tag = 'scoped memory for tpu_custom_call.1']
    #allocation5 [shape = 'u8[4096]{0}', space=vmem, size = 0x1000, scoped, tag = 'input window, operand 1, single buffered']
    #allocation6 [shape = 's32[1]{0}', space=sflag, size = 0x4, scoped, tag = 'scoped memory for tpu_custom_call.1']
    #allocation7 [shape = 'u8[4096]{0}', space=vmem, size = 0x1000, scoped, tag = 'input window, operand 2, single buffered']
    #allocation8 [shape = 'u8[4096]{0}', space=vmem, size = 0x1000, scoped, tag = 'input window, operand 3, single buffered']
    #allocation9 [shape = 's32[1]{0}', space=sflag, size = 0x4, scoped, tag = 'scoped memory for tpu_custom_call.1']
    #allocation10 [shape = 'u8[4096]{0}', space=vmem, size = 0x1000, scoped, tag = 'input window, operand 4, single buffered']
    #allocation11 [shape = 'u8[8192]{0}', space=vmem, size = 0x2000, scoped, tag = 'input window, operand 5, single buffered']
    #allocation12 [shape = 's32[1]{0}', space=sflag, size = 0x4, scoped, tag = 'scoped memory for tpu_custom_call.1']
    #allocation13 [shape = 'u8[65536]{0}', space=vmem, size = 0x10000, scoped, tag = 'input window, operand 7, single buffered']
    #allocation14 [shape = 'u8[4096]{0}', space=vmem, size = 0x1000, scoped, tag = 'output window, operand 0, single buffered']
    %14 = vsyncpa [#allocation3], 0
    %15 = vsyncpa [#allocation6], 0
    %16 = vsyncpa [#allocation9], 0
    %17 = vsyncpa [#allocation12], 0
    %18 = vsyncpa [#allocation4], 0
    // Predicated region
    $region2: #{tpu_custom_call.1} parent=1 // pred_check
      _
    $region3: #{tpu_custom_call.1} parent=1 // pred_check_branch
      %20 = sbr.rel (0) target = $region5
    $region4: #{tpu_custom_call.1} parent=1 // pred_region
      %s22 = ssub.s32 128, 128
      %23 = vsyncadd [#allocation3], %s22
      %s25 = sshll.u32 [#allocation2], 4
      %s26 = int_to_ptr.vmem [resolvable:$true] %s25
      %28 = dma.hbm_to_vmem [thread:$0]  %s0, 128, %s26, [#allocation3]
    $region5: #{tpu_custom_call.1} parent=1 // pred_fallthru
      _
    // Predicated region
    $region6: #{tpu_custom_call.1} parent=1 // pred_check
      _
    $region7: #{tpu_custom_call.1} parent=1 // pred_check_branch
      %30 = sbr.rel (0) target = $region9
    $region8: #{tpu_custom_call.1} parent=1 // pred_region
      %s32 = ssub.s32 128, 128
      %33 = vsyncadd [#allocation6], %s32
      %s35 = sshll.u32 [#allocation5], 4
      %s36 = int_to_ptr.vmem [resolvable:$true] %s35
      %38 = dma.hbm_to_vmem [thread:$0]  %s1, 128, %s36, [#allocation6]
    $region9: #{tpu_custom_call.1} parent=1 // pred_fallthru
      _
    // Predicated region
    $region10: #{tpu_custom_call.1} parent=1 // pred_check
      _
    $region11: #{tpu_custom_call.1} parent=1 // pred_check_branch
      %40 = sbr.rel (0) target = $region13
    $region12: #{tpu_custom_call.1} parent=1 // pred_region
      %s42 = ssub.s32 128, 128
      %43 = vsyncadd [#allocation6], %s42
      %s45 = sshll.u32 [#allocation7], 4
      %s46 = int_to_ptr.vmem [resolvable:$true] %s45
      %48 = dma.hbm_to_vmem [thread:$0]  %s2, 128, %s46, [#allocation6]
    $region13: #{tpu_custom_call.1} parent=1 // pred_fallthru
      _
    // Predicated region
    $region14: #{tpu_custom_call.1} parent=1 // pred_check
      _
    $region15: #{tpu_custom_call.1} parent=1 // pred_check_branch
      %50 = sbr.rel (0) target = $region17
    $region16: #{tpu_custom_call.1} parent=1 // pred_region
      %s52 = ssub.s32 128, 128
      %53 = vsyncadd [#allocation9], %s52
      %s55 = sshll.u32 [#allocation8], 4
      %s56 = int_to_ptr.vmem [resolvable:$true] %s55
      %58 = dma.hbm_to_vmem [thread:$0]  %s3, 128, %s56, [#allocation9]
    $region17: #{tpu_custom_call.1} parent=1 // pred_fallthru
      _
    // Predicated region
    $region18: #{tpu_custom_call.1} parent=1 // pred_check
      _
    $region19: #{tpu_custom_call.1} parent=1 // pred_check_branch
      %60 = sbr.rel (0) target = $region21
    $region20: #{tpu_custom_call.1} parent=1 // pred_region
      %s62 = ssub.s32 128, 128
      %63 = vsyncadd [#allocation9], %s62
      %s65 = sshll.u32 [#allocation10], 4
      %s66 = int_to_ptr.vmem [resolvable:$true] %s65
      %68 = dma.hbm_to_vmem [thread:$0]  %s4, 128, %s66, [#allocation9]
    $region21: #{tpu_custom_call.1} parent=1 // pred_fallthru
      _
    // Predicated region
    $region22: #{tpu_custom_call.1} parent=1 // pred_check
      _
    $region23: #{tpu_custom_call.1} parent=1 // pred_check_branch
      %70 = sbr.rel (0) target = $region25
    $region24: #{tpu_custom_call.1} parent=1 // pred_region
      %s72 = ssub.s32 256, 256
      %73 = vsyncadd [#allocation12], %s72
      %s74 = sshll.u32 [#allocation11], 4
      %s75 = int_to_ptr.vmem [resolvable:$true] %s74
      %80 = dma.hbm_to_vmem [thread:$0]  %s5, 256, %s75, [#allocation12], 128, 128, 8
    $region25: #{tpu_custom_call.1} parent=1 // pred_fallthru
      _
    // Predicated region
    $region26: #{tpu_custom_call.1} parent=1 // pred_check
      _
    $region27: #{tpu_custom_call.1} parent=1 // pred_check_branch
      %82 = sbr.rel (0) target = $region29
    $region28: #{tpu_custom_call.1} parent=1 // pred_region
      _
    $region29: #{tpu_custom_call.1} parent=1 // pred_fallthru
      _
    // Predicated region
    $region30: #{tpu_custom_call.1} parent=1 // pred_check
      _
    $region31: #{tpu_custom_call.1} parent=1 // pred_check_branch
      %84 = sbr.rel (0) target = $region33
    $region32: #{tpu_custom_call.1} parent=1 // pred_region
      %s86 = ssub.s32 2048, 2048
      %87 = vsyncadd [#allocation12], %s86
      %s88 = sshll.u32 [#allocation13], 4
      %s89 = int_to_ptr.vmem [resolvable:$true] %s88
      %94 = dma.hbm_to_vmem [thread:$0]  %s7, 2048, %s89, [#allocation12], 128, 128, 8
    $region33: #{tpu_custom_call.1} parent=1 // pred_fallthru
      _
    // Predicated region
    $region34: #{tpu_custom_call.1} parent=1 // pred_check
      _
    $region35: #{tpu_custom_call.1} parent=1 // pred_check_branch
      %96 = sbr.rel (0) target = $region37
    $region36: #{tpu_custom_call.1} parent=1 // pred_region
      _
    $region37: #{tpu_custom_call.1} parent=1 // pred_fallthru
      _
    // Predicated region
    $region38: #{tpu_custom_call.1} parent=1 // pred_check
      _
    $region39: #{tpu_custom_call.1} parent=1 // pred_check_branch
      %98 = sbr.rel (0) target = $region41
    $region40: #{tpu_custom_call.1} parent=1 // pred_region
      %99 = dma.done [#allocation3], 128
    $region41: #{tpu_custom_call.1} parent=1 // pred_fallthru
      _
    // Predicated region
    $region42: #{tpu_custom_call.1} parent=1 // pred_check
      _
    $region43: #{tpu_custom_call.1} parent=1 // pred_check_branch
      %101 = sbr.rel (0) target = $region45
    $region44: #{tpu_custom_call.1} parent=1 // pred_region
      %102 = dma.done [#allocation6], 128
    $region45: #{tpu_custom_call.1} parent=1 // pred_fallthru
      _
    // Predicated region
    $region46: #{tpu_custom_call.1} parent=1 // pred_check
      _
    $region47: #{tpu_custom_call.1} parent=1 // pred_check_branch
      %104 = sbr.rel (0) target = $region49
    $region48: #{tpu_custom_call.1} parent=1 // pred_region
      %105 = dma.done [#allocation6], 128
    $region49: #{tpu_custom_call.1} parent=1 // pred_fallthru
      _
    // Predicated region
    $region50: #{tpu_custom_call.1} parent=1 // pred_check
      _
    $region51: #{tpu_custom_call.1} parent=1 // pred_check_branch
      %107 = sbr.rel (0) target = $region53
    $region52: #{tpu_custom_call.1} parent=1 // pred_region
      %108 = dma.done [#allocation9], 128
    $region53: #{tpu_custom_call.1} parent=1 // pred_fallthru
      _
    // Predicated region
    $region54: #{tpu_custom_call.1} parent=1 // pred_check
      _
    $region55: #{tpu_custom_call.1} parent=1 // pred_check_branch
      %110 = sbr.rel (0) target = $region57
    $region56: #{tpu_custom_call.1} parent=1 // pred_region
      %111 = dma.done [#allocation9], 128
    $region57: #{tpu_custom_call.1} parent=1 // pred_fallthru
      _
    // Predicated region
    $region58: #{tpu_custom_call.1} parent=1 // pred_check
      _
    $region59: #{tpu_custom_call.1} parent=1 // pred_check_branch
      %113 = sbr.rel (0) target = $region61
    $region60: #{tpu_custom_call.1} parent=1 // pred_region
      %114 = dma.done [#allocation12], 256
    $region61: #{tpu_custom_call.1} parent=1 // pred_fallthru
      _
    // Predicated region
    $region62: #{tpu_custom_call.1} parent=1 // pred_check
      _
    $region63: #{tpu_custom_call.1} parent=1 // pred_check_branch
      %116 = sbr.rel (0) target = $region65
    $region64: #{tpu_custom_call.1} parent=1 // pred_region
      %117 = dma.done [#allocation12], 2048
    $region65: #{tpu_custom_call.1} parent=1 // pred_fallthru
      _
    %v118 = vld [vmem:[#allocation2] sm:$0xff]
    %v119 = vld [vmem:[#allocation8] sm:$0xff]
    %v120 = vld [vmem:[#allocation5] sm:$0xff]
    %v121 = vld [vmem:[#allocation10] sm:$0xff]
    %vm122 = vcmask 64512
    %v124 = vsel %vm122, %v120, 0
    %126 = vmatprep.subr.mxu0 0.0
    %127 = vmatpush1.msra.mxu0 0.0
    %128 = vmatprep.subr.mxu0 0.0
    %129 = vmatpush1.msra.mxu0 0.0
    %130 = vmatprep.subr.mxu0 0.0
    %131 = vmatpush1.msra.mxu0 0.0
    %132 = vmatprep.subr.mxu0 0.0
    %133 = vmatpush1.msra.mxu0 0.0
    %134 = vmatprep.subr.mxu0 0.0
    %135 = vmatpush1.msra.mxu0 0.0
    %136 = vmatprep.subr.mxu0 0.0
    %137 = vmatpush1.msra.mxu0 0.0
    %138 = vmatprep.subr.mxu0 0.0
    %139 = vmatpush1.msra.mxu0 0.0
    %140 = vmatprep.subr.mxu0 0.0
    %141 = vmatpush1.msra.mxu0 0.0
    %142 = vmatprep.subr.mxu0 0.0
    %143 = vmatpush1.msra.mxu0 0.0
    %144 = vmatprep.subr.mxu0 0.0
    %145 = vmatpush1.msra.mxu0 0.0
    %146 = vmatprep.subr.mxu0 0.0
    %147 = vmatpush1.msra.mxu0 0.0
    %148 = vmatprep.subr.mxu0 0.0
    %149 = vmatpush1.msra.mxu0 0.0
    %150 = vmatprep.subr.mxu0 0.0
    %151 = vmatpush1.msra.mxu0 0.0
    %152 = vmatprep.subr.mxu0 0.0
    %153 = vmatpush1.msra.mxu0 0.0
    %154 = vmatprep.subr.mxu0 0.0
    %155 = vmatpush1.msra.mxu0 0.0
    %156 = vmatprep.subr.mxu0 0.0
    %157 = vmatpush1.msra.mxu0 %v121
    %158 = vmatprep.subr.mxu0 0.0
    %159 = vmatpush2.msra.mxu0 0.0
    %160 = vmatprep.subr.mxu0 0.0
    %161 = vmatpush2.msra.mxu0 0.0
    %162 = vmatprep.subr.mxu0 0.0
    %163 = vmatpush2.msra.mxu0 0.0
    %164 = vmatprep.subr.mxu0 0.0
    %165 = vmatpush2.msra.mxu0 0.0
    %166 = vmatprep.subr.mxu0 0.0
    %167 = vmatpush2.msra.mxu0 0.0
    %168 = vmatprep.subr.mxu0 0.0
    %169 = vmatpush2.msra.mxu0 0.0
    %170 = vmatprep.subr.mxu0 0.0
    %171 = vmatpush2.msra.mxu0 0.0
    %172 = vmatprep.subr.mxu0 0.0
    %173 = vmatpush2.msra.mxu0 0.0
    %174 = vmatprep.subr.mxu0 0.0
    %175 = vmatpush2.msra.mxu0 0.0
    %176 = vmatprep.subr.mxu0 0.0
    %177 = vmatpush2.msra.mxu0 0.0
    %178 = vmatprep.subr.mxu0 0.0
    %179 = vmatpush2.msra.mxu0 0.0
    %180 = vmatprep.subr.mxu0 0.0
    %181 = vmatpush2.msra.mxu0 0.0
    %182 = vmatprep.subr.mxu0 0.0
    %183 = vmatpush2.msra.mxu0 0.0
    %184 = vmatprep.subr.mxu0 0.0
    %185 = vmatpush2.msra.mxu0 0.0
    %186 = vmatprep.subr.mxu0 0.0
    %187 = vmatpush2.msra.mxu0 0.0
    %188 = vmatprep.subr.mxu0 0.0
    %189 = vmatpush2.msra.mxu0 0.0
    %190 = vmatprep.mubr.f32.mxu0 0.0
    %191 = vmatmul.mubr.f32.gmra.mxu0 %v124
    %v192 = vpop.f32.mrf.mxu0
    %v193 = vadd.f32 0.0, %v192
    %v194 = vpop.f32.mrf.mxu0
    %195 = vdwg.mxu0
    %v197 = vsel %vm122, %v118, 0
    %199 = vmatprep.subr.mxu0 0.0
    %200 = vmatpush1.msra.mxu0 0.0
    %201 = vmatprep.subr.mxu0 0.0
    %202 = vmatpush1.msra.mxu0 0.0
    %203 = vmatprep.subr.mxu0 0.0
    %204 = vmatpush1.msra.mxu0 0.0
    %205 = vmatprep.subr.mxu0 0.0
    %206 = vmatpush1.msra.mxu0 0.0
    %207 = vmatprep.subr.mxu0 0.0
    %208 = vmatpush1.msra.mxu0 0.0
    %209 = vmatprep.subr.mxu0 0.0
    %210 = vmatpush1.msra.mxu0 0.0
    %211 = vmatprep.subr.mxu0 0.0
    %212 = vmatpush1.msra.mxu0 0.0
    %213 = vmatprep.subr.mxu0 0.0
    %214 = vmatpush1.msra.mxu0 0.0
    %215 = vmatprep.subr.mxu0 0.0
    %216 = vmatpush1.msra.mxu0 0.0
    %217 = vmatprep.subr.mxu0 0.0
    %218 = vmatpush1.msra.mxu0 0.0
    %219 = vmatprep.subr.mxu0 0.0
    %220 = vmatpush1.msra.mxu0 0.0
    %221 = vmatprep.subr.mxu0 0.0
    %222 = vmatpush1.msra.mxu0 0.0
    %223 = vmatprep.subr.mxu0 0.0
    %224 = vmatpush1.msra.mxu0 0.0
    %225 = vmatprep.subr.mxu0 0.0
    %226 = vmatpush1.msra.mxu0 0.0
    %227 = vmatprep.subr.mxu0 0.0
    %228 = vmatpush1.msra.mxu0 0.0
    %229 = vmatprep.subr.mxu0 0.0
    %230 = vmatpush1.msra.mxu0 %v119
    %231 = vmatprep.subr.mxu0 0.0
    %232 = vmatpush2.msra.mxu0 0.0
    %233 = vmatprep.subr.mxu0 0.0
    %234 = vmatpush2.msra.mxu0 0.0
    %235 = vmatprep.subr.mxu0 0.0
    %236 = vmatpush2.msra.mxu0 0.0
    %237 = vmatprep.subr.mxu0 0.0
    %238 = vmatpush2.msra.mxu0 0.0
    %239 = vmatprep.subr.mxu0 0.0
    %240 = vmatpush2.msra.mxu0 0.0
    %241 = vmatprep.subr.mxu0 0.0
    %242 = vmatpush2.msra.mxu0 0.0
    %243 = vmatprep.subr.mxu0 0.0
    %244 = vmatpush2.msra.mxu0 0.0
    %245 = vmatprep.subr.mxu0 0.0
    %246 = vmatpush2.msra.mxu0 0.0
    %247 = vmatprep.subr.mxu0 0.0
    %248 = vmatpush2.msra.mxu0 0.0
    %249 = vmatprep.subr.mxu0 0.0
    %250 = vmatpush2.msra.mxu0 0.0
    %251 = vmatprep.subr.mxu0 0.0
    %252 = vmatpush2.msra.mxu0 0.0
    %253 = vmatprep.subr.mxu0 0.0
    %254 = vmatpush2.msra.mxu0 0.0
    %255 = vmatprep.subr.mxu0 0.0
    %256 = vmatpush2.msra.mxu0 0.0
    %257 = vmatprep.subr.mxu0 0.0
    %258 = vmatpush2.msra.mxu0 0.0
    %259 = vmatprep.subr.mxu0 0.0
    %260 = vmatpush2.msra.mxu0 0.0
    %261 = vmatprep.subr.mxu0 0.0
    %262 = vmatpush2.msra.mxu0 0.0
    %263 = vmatprep.mubr.f32.mxu0 0.0
    %264 = vmatmul.mubr.f32.gmra.mxu0 %v197
    %v265 = vpop.f32.mrf.mxu0
    %v266 = vadd.f32 %v193, %v265
    %v267 = vpop.f32.mrf.mxu0
    %268 = vdwg.mxu0
    %v269 = vld [vmem:[#allocation7] sm:$0xff]
    %v270 = vld [vmem:[#allocation11] sm:$0xff]
    %v271 = vld [vmem:[#allocation11 + $0x8] sm:$0xff]
    %vm272 = vcmask 130048
    %v274 = vsel %vm272, %v269, 0
    %276 = vmatprep.subr.mxu0 0.0
    %277 = vmatpush1.msra.mxu0 0.0
    %278 = vmatprep.subr.mxu0 0.0
    %279 = vmatpush1.msra.mxu0 0.0
    %280 = vmatprep.subr.mxu0 0.0
    %281 = vmatpush1.msra.mxu0 0.0
    %282 = vmatprep.subr.mxu0 0.0
    %283 = vmatpush1.msra.mxu0 0.0
    %284 = vmatprep.subr.mxu0 0.0
    %285 = vmatpush1.msra.mxu0 0.0
    %286 = vmatprep.subr.mxu0 0.0
    %287 = vmatpush1.msra.mxu0 0.0
    %288 = vmatprep.subr.mxu0 0.0
    %289 = vmatpush1.msra.mxu0 0.0
    %290 = vmatprep.subr.mxu0 0.0
    %291 = vmatpush1.msra.mxu0 0.0
    %292 = vmatprep.subr.mxu0 0.0
    %293 = vmatpush1.msra.mxu0 0.0
    %294 = vmatprep.subr.mxu0 0.0
    %295 = vmatpush1.msra.mxu0 0.0
    %296 = vmatprep.subr.mxu0 0.0
    %297 = vmatpush1.msra.mxu0 0.0
    %298 = vmatprep.subr.mxu0 0.0
    %299 = vmatpush1.msra.mxu0 0.0
    %300 = vmatprep.subr.mxu0 0.0
    %301 = vmatpush1.msra.mxu0 0.0
    %302 = vmatprep.subr.mxu0 0.0
    %303 = vmatpush1.msra.mxu0 0.0
    %304 = vmatprep.subr.mxu0 0.0
    %305 = vmatpush1.msra.mxu0 %v271
    %306 = vmatprep.subr.mxu0 0.0
    %307 = vmatpush1.msra.mxu0 %v270
    %308 = vmatprep.subr.mxu0 0.0
    %309 = vmatpush2.msra.mxu0 0.0
    %310 = vmatprep.subr.mxu0 0.0
    %311 = vmatpush2.msra.mxu0 0.0
    %312 = vmatprep.subr.mxu0 0.0
    %313 = vmatpush2.msra.mxu0 0.0
    %314 = vmatprep.subr.mxu0 0.0
    %315 = vmatpush2.msra.mxu0 0.0
    %316 = vmatprep.subr.mxu0 0.0
    %317 = vmatpush2.msra.mxu0 0.0
    %318 = vmatprep.subr.mxu0 0.0
    %319 = vmatpush2.msra.mxu0 0.0
    %320 = vmatprep.subr.mxu0 0.0
    %321 = vmatpush2.msra.mxu0 0.0
    %322 = vmatprep.subr.mxu0 0.0
    %323 = vmatpush2.msra.mxu0 0.0
    %324 = vmatprep.subr.mxu0 0.0
    %325 = vmatpush2.msra.mxu0 0.0
    %326 = vmatprep.subr.mxu0 0.0
    %327 = vmatpush2.msra.mxu0 0.0
    %328 = vmatprep.subr.mxu0 0.0
    %329 = vmatpush2.msra.mxu0 0.0
    %330 = vmatprep.subr.mxu0 0.0
    %331 = vmatpush2.msra.mxu0 0.0
    %332 = vmatprep.subr.mxu0 0.0
    %333 = vmatpush2.msra.mxu0 0.0
    %334 = vmatprep.subr.mxu0 0.0
    %335 = vmatpush2.msra.mxu0 0.0
    %336 = vmatprep.subr.mxu0 0.0
    %337 = vmatpush2.msra.mxu0 0.0
    %338 = vmatprep.subr.mxu0 0.0
    %339 = vmatpush2.msra.mxu0 0.0
    %340 = vmatprep.mubr.f32.mxu0 0.0
    %341 = vmatmul.mubr.f32.gmra.mxu0 %v274
    %v342 = vpop.f32.mrf.mxu0
    %v343 = vadd.f32 0.0, %v342
    %v344 = vpop.f32.mrf.mxu0
    %345 = vdwg.mxu0
    %v346 = vadd.f32 %v266, %v343
    %v347 = vld [vmem:[%s6] sm:$0x1]
    %v349 = vlaneseq
    %v350 = vshrl.u32 %v349, 7
    %v351 = vsub.s32 0, %v350
    %v352 = vrot.slane %v347, %v351
    %v354 = vadd.f32 %v346, %v352
    %v355 = vmax.f32 %v354, 0.0
    %v356 = vld [vmem:[#allocation13] sm:$0xff]
    %v357 = vld [vmem:[#allocation13 + $0x8] sm:$0xff]
    %v358 = vld [vmem:[#allocation13 + $0x10] sm:$0xff]
    %v359 = vld [vmem:[#allocation13 + $0x18] sm:$0xff]
    %v360 = vld [vmem:[#allocation13 + $0x20] sm:$0xff]
    %v361 = vld [vmem:[#allocation13 + $0x28] sm:$0xff]
    %v362 = vld [vmem:[#allocation13 + $0x30] sm:$0xff]
    %v363 = vld [vmem:[#allocation13 + $0x38] sm:$0xff]
    %v364 = vld [vmem:[#allocation13 + $0x40] sm:$0xff]
    %v365 = vld [vmem:[#allocation13 + $0x48] sm:$0xff]
    %v366 = vld [vmem:[#allocation13 + $0x50] sm:$0xff]
    %v367 = vld [vmem:[#allocation13 + $0x58] sm:$0xff]
    %v368 = vld [vmem:[#allocation13 + $0x60] sm:$0xff]
    %v369 = vld [vmem:[#allocation13 + $0x68] sm:$0xff]
    %v370 = vld [vmem:[#allocation13 + $0x70] sm:$0xff]
    %v371 = vld [vmem:[#allocation13 + $0x78] sm:$0xff]
    %v372 = vld [vmem:[%s8] sm:$0x1]
    %v374 = vlaneseq
    %v375 = vshrl.u32 %v374, 7
    %v376 = vsub.s32 0, %v375
    %v377 = vrot.slane %v372, %v376
    %379 = vmatprep.subr.mxu0 0.0
    %380 = vmatpush1.msra.mxu0 %v371
    %381 = vmatprep.subr.mxu0 0.0
    %382 = vmatpush1.msra.mxu0 %v370
    %383 = vmatprep.subr.mxu0 0.0
    %384 = vmatpush1.msra.mxu0 %v369
    %385 = vmatprep.subr.mxu0 0.0
    %386 = vmatpush1.msra.mxu0 %v368
    %387 = vmatprep.subr.mxu0 0.0
    %388 = vmatpush1.msra.mxu0 %v367
    %389 = vmatprep.subr.mxu0 0.0
    %390 = vmatpush1.msra.mxu0 %v366
    %391 = vmatprep.subr.mxu0 0.0
    %392 = vmatpush1.msra.mxu0 %v365
    %393 = vmatprep.subr.mxu0 0.0
    %394 = vmatpush1.msra.mxu0 %v364
    %395 = vmatprep.subr.mxu0 0.0
    %396 = vmatpush1.msra.mxu0 %v363
    %397 = vmatprep.subr.mxu0 0.0
    %398 = vmatpush1.msra.mxu0 %v362
    %399 = vmatprep.subr.mxu0 0.0
    %400 = vmatpush1.msra.mxu0 %v361
    %401 = vmatprep.subr.mxu0 0.0
    %402 = vmatpush1.msra.mxu0 %v360
    %403 = vmatprep.subr.mxu0 0.0
    %404 = vmatpush1.msra.mxu0 %v359
    %405 = vmatprep.subr.mxu0 0.0
    %406 = vmatpush1.msra.mxu0 %v358
    %407 = vmatprep.subr.mxu0 0.0
    %408 = vmatpush1.msra.mxu0 %v357
    %409 = vmatprep.subr.mxu0 0.0
    %410 = vmatpush1.msra.mxu0 %v356
    %411 = vmatprep.subr.mxu0 0.0
    %412 = vmatpush2.msra.mxu0 0.0
    %413 = vmatprep.subr.mxu0 0.0
    %414 = vmatpush2.msra.mxu0 0.0
    %415 = vmatprep.subr.mxu0 0.0
    %416 = vmatpush2.msra.mxu0 0.0
    %417 = vmatprep.subr.mxu0 0.0
    %418 = vmatpush2.msra.mxu0 0.0
    %419 = vmatprep.subr.mxu0 0.0
    %420 = vmatpush2.msra.mxu0 0.0
    %421 = vmatprep.subr.mxu0 0.0
    %422 = vmatpush2.msra.mxu0 0.0
    %423 = vmatprep.subr.mxu0 0.0
    %424 = vmatpush2.msra.mxu0 0.0
    %425 = vmatprep.subr.mxu0 0.0
    %426 = vmatpush2.msra.mxu0 0.0
    %427 = vmatprep.subr.mxu0 0.0
    %428 = vmatpush2.msra.mxu0 0.0
    %429 = vmatprep.subr.mxu0 0.0
    %430 = vmatpush2.msra.mxu0 0.0
    %431 = vmatprep.subr.mxu0 0.0
    %432 = vmatpush2.msra.mxu0 0.0
    %433 = vmatprep.subr.mxu0 0.0
    %434 = vmatpush2.msra.mxu0 0.0
    %435 = vmatprep.subr.mxu0 0.0
    %436 = vmatpush2.msra.mxu0 0.0
    %437 = vmatprep.subr.mxu0 0.0
    %438 = vmatpush2.msra.mxu0 0.0
    %439 = vmatprep.subr.mxu0 0.0
    %440 = vmatpush2.msra.mxu0 0.0
    %441 = vmatprep.subr.mxu0 0.0
    %442 = vmatpush2.msra.mxu0 0.0
    %443 = vmatprep.mubr.f32.mxu0 0.0
    %444 = vmatmul.mubr.f32.gmra.mxu0 %v355
    %v445 = vpop.f32.mrf.mxu0
    %v446 = vadd.f32 %v377, %v445
    %v447 = vpop.f32.mrf.mxu0
    %448 = vdwg.mxu0
    %v449 = vmax.f32 %v446, 0.0
    %450 = vst [vmem:[#allocation14] sm:$0xff] %v449
    // Predicated region
    $region66: #{tpu_custom_call.1} parent=1 // pred_check
      _
    $region67: #{tpu_custom_call.1} parent=1 // pred_check_branch
      %452 = sbr.rel (0) target = $region69
    $region68: #{tpu_custom_call.1} parent=1 // pred_region
      %s454 = ssub.s32 128, 128
      %455 = vsyncadd [#allocation4], %s454
      %s457 = sshll.u32 [#allocation14], 4
      %s458 = int_to_ptr.vmem [resolvable:$true] %s457
      %460 = dma.vmem_to_hbm [thread:$0]  %s458, 128, %s9, [#allocation4]
    $region69: #{tpu_custom_call.1} parent=1 // pred_fallthru
      _
    // Predicated region
    $region70: #{tpu_custom_call.1} parent=1 // pred_check
      _
    $region71: #{tpu_custom_call.1} parent=1 // pred_check_branch
      %462 = sbr.rel (0) target = $region73
    $region72: #{tpu_custom_call.1} parent=1 // pred_region
      %463 = dma.done [#allocation4], 128
    $region73: #{tpu_custom_call.1} parent=1 // pred_fallthru
      _
    %464 = vsyncpa [#allocation3], 1
    %465 = vsyncpa [#allocation6], 1
    %466 = vsyncpa [#allocation9], 1
    %467 = vsyncpa [#allocation12], 1
    %468 = vsyncpa [#allocation4], 1

</llo_original>
